<compile_context>
chip_gen: v7x
topology: tpu7x:2x2x1
jax: 0.10.0
libtpu: 0.0.40
codegen_flags: <defaults>
</compile_context>

<pallas_src>
import functools

import jax
import jax.numpy as jnp
from jax.experimental import pallas as pl
from jax.experimental.pallas import tpu as pltpu

PRIMITIVES = ["none", "skip_connect", "nor_conv_1x1", "nor_conv_3x3", "avg_pool_3x3"]
BN_EPS = 1e-5


def _round_up(x, m):
    return ((x + m - 1) // m) * m


# ----------------------------- Pallas kernels ------------------------------ #
def _tile_gemm_stats(p_ref, w_ref, stat_ref, b):
    """y = W @ relu(patches[b]) on the MXU; emit per-group (sum, centred SSQ)."""
    # ReLU commutes with im2col (gather), zero-padding and the bf16 cast.
    a = jnp.maximum(p_ref[b], 0)                                        # bf16, VPU
    y = jnp.dot(w_ref[...], a, preferred_element_type=jnp.float32)      # (c, t_hw) f32
    s = jnp.sum(y, axis=1, keepdims=True)                               # (c, 1)  XLU
    mu = s * (1.0 / float(y.shape[1]))
    d = y - mu
    m2 = jnp.sum(d * d, axis=1, keepdims=True)                          # centred SSQ
    stat_ref[b, 0, :, 0:1] = s
    stat_ref[b, 0, :, 1:2] = m2
    return y


def _stats_kernel(p_ref, w_ref, stat_ref):
    """Pass 1 (recompute path): BN partial statistics only, y is discarded."""
    for b in range(p_ref.shape[0]):
        _tile_gemm_stats(p_ref, w_ref, stat_ref, b)


def _stats_store_kernel(p_ref, w_ref, stat_ref, z_ref):
    """Pass 1 (store path): BN partial statistics + un-padded f32 conv output."""
    for b in range(p_ref.shape[0]):
        z_ref[b] = _tile_gemm_stats(p_ref, w_ref, stat_ref, b)


def _bn_apply_inplace_kernel(z_ref, ss_ref, o_ref):
    """Pass 2 (store path): out = z * scale + shift (z buffer aliased to out)."""
    scale = ss_ref[0]                                                   # (c, 1)
    shift = ss_ref[1]
    o_ref[...] = z_ref[...] * scale + shift


def _bn_apply_recompute_kernel(p_ref, w_ref, ss_ref, o_ref):
    """Pass 2 (recompute path): redo the cheap GEMM, then out = y*scale + shift."""
    scale = ss_ref[0]                                                   # (c, 1)
    shift = ss_ref[1]
    for b in range(p_ref.shape[0]):
        a = jnp.maximum(p_ref[b], 0)
        y = jnp.dot(w_ref[...], a, preferred_element_type=jnp.float32)
        o_ref[b] = y * scale + shift


# ------------------------- tiling / sizing helpers -------------------------- #
def _vmem_budget_bytes():
    """~half the chip's VMEM (64 MiB on v5e/v6e, 32 MiB on v7x's 64 MiB/TC)."""
    try:
        cap = int(pltpu.get_tpu_info().vmem_capacity_bytes)
    except Exception:  # older jax / query unavailable -> conservative default
        cap = 64 * 1024 * 1024
    return max(16 * 1024 * 1024, min(cap // 2, 64 * 1024 * 1024))


def _pick_hw_tile(hw, cap=2048):
    """Lane (HW) tile: full map if small, else the largest 128-multiple divisor."""
    if hw <= cap or hw % 128 != 0:
        return hw
    for t in range(cap - cap % 128, 127, -128):
        if hw % t == 0:
            return t
    return hw


def _pick_bn(n, k_p, c_out, t_hw, budget):
    """Largest per-step image count whose double-buffered working set fits."""
    best = 1
    for cand in range(1, min(n, 8) + 1):
        if n % cand:
            continue
        need = (
            2 * cand * k_p * t_hw * 2        # patches blocks (bf16, double-buffered)
            + 2 * c_out * k_p * 2            # weights (bf16)
            + 4 * cand * c_out * t_hw * 4    # z-in + out (worst pass), f32, x2 buffers
            + 2 * cand * c_out * t_hw * 4    # in-kernel f32 temporaries (unrolled loop)
            + (1 << 20)                      # headroom
        )
        if need <= budget:
            best = cand
    return best


# ------------------------------ JAX glue ----------------------------------- #
def _im2col_nchw(x_bf16, kh, kw, stride, pad, k_padded):
    """NCHW im2col -> [N, k_padded, Ho*Wo] bf16 with K ordered (kh, kw, c_in).

    The zero K-padding slab is folded into the single concatenate, so padding
    K to a bf16-friendly multiple costs no extra HBM pass."""
    n, c, h, w = x_bf16.shape
    xp = jnp.pad(x_bf16, ((0, 0), (0, 0), (pad, pad), (pad, pad)))
    ho = (h + 2 * pad - kh) // stride + 1
    wo = (w + 2 * pad - kw) // stride + 1
    cols = []
    for i in range(kh):
        for j in range(kw):
            cols.append(
                xp[:, :, i : i + ho * stride : stride, j : j + wo * stride : stride]
            )
    k = c * kh * kw
    if k_padded > k:
        cols.append(jnp.zeros((n, k_padded - k, ho, wo), x_bf16.dtype))
    patches = jnp.concatenate(cols, axis=1)                 # [N, k_padded, Ho, Wo]
    return patches.reshape(n, k_padded, ho * wo), (ho, wo)


@functools.partial(jax.jit, static_argnames=("k", "stride", "pad", "vmem_budget"))
def _relu_conv_bn_nchw(x_nchw, weight, *, k, stride, pad, vmem_budget):
    n, c_in, _, _ = x_nchw.shape
    c_out = weight.shape[0]
    kk = c_in * k * k
    k_p = _round_up(max(kk, 16), 16)              # bf16 sublane-friendly K

    # Cast to bf16 *before* im2col so the materialized patches stream is
    # half-width in HBM; stay in NCHW (no layout transposes anywhere).
    xb = x_nchw.astype(jnp.bfloat16)
    patches, (ho, wo) = _im2col_nchw(xb, k, k, stride, pad, k_p)   # [N, k_p, HW]
    hw = ho * wo
    t_hw = _pick_hw_tile(hw)
    n_hw_tiles = hw // t_hw

    # [C_out, C_in, KH, KW] -> [C_out, (KH, KW, C_in)] to match the im2col K order.
    w_mat = jnp.transpose(weight, (0, 2, 3, 1)).reshape(c_out, kk).astype(jnp.bfloat16)
    w_mat = jnp.pad(w_mat, ((0, 0), (0, k_p - kk)))

    bn = _pick_bn(n, k_p, c_out, t_hw, vmem_budget)
    grid = (n // bn, n_hw_tiles)
    cparams = pltpu.CompilerParams(
        dimension_semantics=("parallel", "parallel"),
        vmem_limit_bytes=vmem_budget,
    )

    p_spec = pl.BlockSpec((bn, k_p, t_hw), lambda ib, it: (ib, 0, it))
    w_spec = pl.BlockSpec((c_out, k_p), lambda ib, it: (0, 0))
    stat_spec = pl.BlockSpec((bn, 1, c_out, 2), lambda ib, it: (ib, it, 0, 0))
    ss_spec = pl.BlockSpec((2, c_out, 1), lambda ib, it: (0, 0, 0))
    y_spec = pl.BlockSpec((bn, c_out, t_hw), lambda ib, it: (ib, 0, it))

    stats_shape = jax.ShapeDtypeStruct((n, n_hw_tiles, c_out, 2), jnp.float32)
    y_shape = jax.ShapeDtypeStruct((n, c_out, hw), jnp.float32)

    # HBM-traffic crossover: re-reading the bf16 patches in pass 2 costs
    # 2*K bytes/row, while an un-padded f32 z round-trip costs 8*c_out bytes/row.
    store_z = kk >= 4 * c_out

    # ---- Pass 1: ReLU + GEMM + per-group BN partial statistics ---- #
    if store_z:
        stats, z = pl.pallas_call(
            _stats_store_kernel,
            out_shape=(stats_shape, y_shape),
            grid=grid,
            in_specs=[p_spec, w_spec],
            out_specs=(stat_spec, y_spec),
            compiler_params=cparams,
        )(patches, w_mat)
    else:
        stats = pl.pallas_call(
            _stats_kernel,
            out_shape=stats_shape,
            grid=grid,
            in_specs=[p_spec, w_spec],
            out_specs=stat_spec,
            compiler_params=cparams,
        )(patches, w_mat)

    # ---- Finalize BN statistics (tiny XLA; exact group / Chan combine) ---- #
    s_g = stats[..., 0]                           # (N, T, c_out) per-group sums
    m2_g = stats[..., 1]                          # per-group centred sum of squares
    cnt = float(t_hw)                             # samples per group (exact, no padding)
    m_total = float(n * hw)
    mean = jnp.sum(s_g, axis=(0, 1)) / m_total
    mu_g = s_g * (1.0 / cnt)
    var = (
        jnp.sum(m2_g, axis=(0, 1))
        + cnt * jnp.sum((mu_g - mean) ** 2, axis=(0, 1))
    ) / m_total
    inv = jax.lax.rsqrt(jnp.maximum(var, 0.0) + BN_EPS)
    ss = jnp.stack([inv, -mean * inv], axis=0)[:, :, None]    # (2, c_out, 1) f32

    # ---- Pass 2: apply BN, lane-dense output directly in NCHW layout ---- #
    if store_z:
        out = pl.pallas_call(
            _bn_apply_inplace_kernel,
            out_shape=y_shape,
            grid=grid,
            in_specs=[y_spec, ss_spec],
            out_specs=y_spec,
            input_output_aliases={0: 0},          # rescale z in place
            compiler_params=cparams,
        )(z, ss)
    else:
        out = pl.pallas_call(
            _bn_apply_recompute_kernel,
            out_shape=y_shape,
            grid=grid,
            in_specs=[p_spec, w_spec, ss_spec],
            out_specs=y_spec,
            compiler_params=cparams,
        )(patches, w_mat, ss)

    return out.reshape(n, c_out, ho, wo)          # already NCHW, no transpose


class NewMixedOpConv:
    """JAX/Pallas port of NewMixedOp_conv (conv primitives only)."""

    def __init__(self, c_in, c_out, stride, chosen_op, key):
        self.primitive = PRIMITIVES[chosen_op[1]]
        if self.primitive == "nor_conv_3x3":
            self.k, self.pad = 3, 1
        elif self.primitive == "nor_conv_1x1":
            self.k, self.pad = 1, 0
        else:
            # TODO(synk): 'none' / 'skip_connect' / 'avg_pool_3x3' primitives are
            # not ported; this covers the conv ops of the mixed op.
            raise NotImplementedError(self.primitive)
        self.stride = stride
        self.c_in, self.c_out = c_in, c_out
        self.vmem_budget = _vmem_budget_bytes()   # generation-aware VMEM budget
        # Deterministic Kaiming-style init, torch Conv2d layout [C_out,C_in,KH,KW].
        fan_in = c_in * self.k * self.k
        self.weight = (
            jax.random.normal(key, (c_out, c_in, self.k, self.k), jnp.float32)
            * jnp.sqrt(2.0 / fan_in)
        )

    def __call__(self, x_nchw):
        return _relu_conv_bn_nchw(
            x_nchw,
            self.weight,
            k=self.k,
            stride=self.stride,
            pad=self.pad,
            vmem_budget=self.vmem_budget,
        )


# ---------------------------- reference check ------------------------------ #
def _reference(x_nchw, weight, stride, pad):
    # Matches the kernel's precision: bf16 conv inputs, f32 accumulation & BN.
    a = jnp.maximum(x_nchw, 0.0).astype(jnp.bfloat16)
    w = weight.astype(jnp.bfloat16)
    y = jax.lax.conv_general_dilated(
        a,
        w,
        window_strides=(stride, stride),
        padding=((pad, pad), (pad, pad)),
        dimension_numbers=("NCHW", "OIHW", "NCHW"),
        preferred_element_type=jnp.float32,
    )
    mean = jnp.mean(y, axis=(0, 2, 3), keepdims=True)
    var = jnp.mean((y - mean) ** 2, axis=(0, 2, 3), keepdims=True)
    return (y - mean) * jax.lax.rsqrt(var + BN_EPS)


if __name__ == "__main__":
    key = jax.random.PRNGKey(0)
    k_x, k_w = jax.random.split(key)

    N, C_IN, H, W = 2, 4, 16, 16
    C_OUT, STRIDE = 8, 1
    x = jax.random.normal(k_x, (N, C_IN, H, W), jnp.float32)

    # 3x3 primitive (chosen_op[1] == 3): K=36 >= 4*c_out -> store-z path
    # (pass 1 stats + f32 z, pass 2 in-place BN rescale via aliasing).
    op3 = NewMixedOpConv(C_IN, C_OUT, STRIDE, (0, 3), k_w)
    out3 = jax.block_until_ready(op3(x))
    ref3 = _reference(x, op3.weight, STRIDE, op3.pad)
    assert out3.shape == ref3.shape, (out3.shape, ref3.shape)
    assert jnp.allclose(out3, ref3, atol=1e-3, rtol=1e-3), float(
        jnp.max(jnp.abs(out3 - ref3))
    )

    # 1x1 primitive (chosen_op[1] == 2): K=4 < 4*c_out -> recompute path
    # (pass 1 stats only, pass 2 recomputes the GEMM from the bf16 patches).
    op1 = NewMixedOpConv(C_IN, C_OUT, STRIDE, (0, 2), k_w)
    out1 = jax.block_until_ready(op1(x))
    ref1 = _reference(x, op1.weight, STRIDE, op1.pad)
    assert out1.shape == ref1.shape, (out1.shape, ref1.shape)
    assert jnp.allclose(out1, ref1, atol=1e-3, rtol=1e-3), float(
        jnp.max(jnp.abs(out1 - ref1))
    )

    print("KERNEL_OK")
</pallas_src>

<mosaic_0001>
module attributes {stable_mosaic.version = 11 : i64} {
  func.func @_stats_store_kernel(%arg0: i32, %arg1: i32, %arg2: memref<2x48x256xbf16, #tpu.memory_space<vmem>>, %arg3: memref<8x48xbf16, #tpu.memory_space<vmem>>, %arg4: memref<2x1x8x2xf32, #tpu.memory_space<vmem>>, %arg5: memref<2x8x256xf32, #tpu.memory_space<vmem>>) attributes {dimension_semantics = [#tpu.dimension_semantics<parallel>, #tpu.dimension_semantics<parallel>], iteration_bounds = array<i64: 1, 1>, scalar_prefetch = 0 : i64, scratch_operands = 0 : i64, tpu.core_type = #tpu.core_type<tc>, window_params = [{transform_indices = @transform_0, window_bounds = array<i64: 2, 48, 256>}, {pipeline_mode = #tpu.pipeline_mode<synchronous>, transform_indices = @transform_1, window_bounds = array<i64: 8, 48>}, {transform_indices = @transform_2, window_bounds = array<i64: 2, 1, 8, 2>}, {transform_indices = @transform_3, window_bounds = array<i64: 2, 8, 256>}]} {
    %c0 = arith.constant 0 : index
    %c0_0 = arith.constant 0 : index
    %c0_1 = arith.constant 0 : index
    %0 = vector.load %arg2[%c0, %c0_0, %c0_1] : memref<2x48x256xbf16, #tpu.memory_space<vmem>>, vector<1x48x256xbf16>
    %1 = vector.shape_cast %0 : vector<1x48x256xbf16> to vector<48x256xbf16>
    %cst = arith.constant 0.000000e+00 : bf16
    %2 = vector.broadcast %cst : bf16 to vector<48x256xbf16>
    %3 = arith.maximumf %1, %2 : vector<48x256xbf16>
    %c0_2 = arith.constant 0 : index
    %c0_3 = arith.constant 0 : index
    %4 = vector.load %arg3[%c0_2, %c0_3] : memref<8x48xbf16, #tpu.memory_space<vmem>>, vector<8x48xbf16>
    %cst_4 = arith.constant dense<0.000000e+00> : vector<8x256xf32>
    %5 = tpu.matmul %4, %3, %cst_4 {dimension_numbers = #tpu.dot_dimension_numbers<[1], [0], [0], [1], [0, 0, 1, 1], [], []>} : vector<8x48xbf16>, vector<48x256xbf16>, vector<8x256xf32> -> vector<8x256xf32>
    %cst_5 = arith.constant dense<0.000000e+00> : vector<8xf32>
    %6 = vector.multi_reduction <add>, %5, %cst_5 [1] : vector<8x256xf32> to vector<8xf32>
    %7 = vector.shape_cast %6 : vector<8xf32> to vector<8x1xf32>
    %cst_6 = arith.constant 3.906250e-03 : f32
    %8 = vector.broadcast %cst_6 : f32 to vector<8x1xf32>
    %9 = arith.mulf %7, %8 : vector<8x1xf32>
    %10 = vector.broadcast %9 : vector<8x1xf32> to vector<8x256xf32>
    %11 = arith.subf %5, %10 : vector<8x256xf32>
    %12 = arith.mulf %11, %11 : vector<8x256xf32>
    %cst_7 = arith.constant dense<0.000000e+00> : vector<8xf32>
    %13 = vector.multi_reduction <add>, %12, %cst_7 [1] : vector<8x256xf32> to vector<8xf32>
    %14 = vector.shape_cast %13 : vector<8xf32> to vector<8x1xf32>
    %c0_8 = arith.constant 0 : index
    %c0_9 = arith.constant 0 : index
    %c0_10 = arith.constant 0 : index
    %c0_11 = arith.constant 0 : index
    %15 = vector.load %arg4[%c0_8, %c0_9, %c0_10, %c0_11] : memref<2x1x8x2xf32, #tpu.memory_space<vmem>>, vector<1x1x8x1xf32>
    %16 = vector.shape_cast %15 : vector<1x1x8x1xf32> to vector<8x1xf32>
    %17 = vector.shape_cast %7 : vector<8x1xf32> to vector<1x1x8x1xf32>
    tpu.vector_store %arg4[%c0_8, %c0_9, %c0_10, %c0_11], %17 {strides = array<i32>} : memref<2x1x8x2xf32, #tpu.memory_space<vmem>>, vector<1x1x8x1xf32>,
    %c0_12 = arith.constant 0 : index
    %c0_13 = arith.constant 0 : index
    %c0_14 = arith.constant 0 : index
    %c1 = arith.constant 1 : index
    %18 = vector.load %arg4[%c0_12, %c0_13, %c0_14, %c1] : memref<2x1x8x2xf32, #tpu.memory_space<vmem>>, vector<1x1x8x1xf32>
    %19 = vector.shape_cast %18 : vector<1x1x8x1xf32> to vector<8x1xf32>
    %20 = vector.shape_cast %14 : vector<8x1xf32> to vector<1x1x8x1xf32>
    tpu.vector_store %arg4[%c0_12, %c0_13, %c0_14, %c1], %20 {strides = array<i32>} : memref<2x1x8x2xf32, #tpu.memory_space<vmem>>, vector<1x1x8x1xf32>,
    %c0_15 = arith.constant 0 : index
    %c0_16 = arith.constant 0 : index
    %c0_17 = arith.constant 0 : index
    %21 = vector.load %arg5[%c0_15, %c0_16, %c0_17] : memref<2x8x256xf32, #tpu.memory_space<vmem>>, vector<1x8x256xf32>
    %22 = vector.shape_cast %21 : vector<1x8x256xf32> to vector<8x256xf32>
    %23 = vector.shape_cast %5 : vector<8x256xf32> to vector<1x8x256xf32>
    tpu.vector_store %arg5[%c0_15, %c0_16, %c0_17], %23 {strides = array<i32>} : memref<2x8x256xf32, #tpu.memory_space<vmem>>, vector<1x8x256xf32>,
    %c1_18 = arith.constant 1 : index
    %c0_19 = arith.constant 0 : index
    %c0_20 = arith.constant 0 : index
    %24 = vector.load %arg2[%c1_18, %c0_19, %c0_20] : memref<2x48x256xbf16, #tpu.memory_space<vmem>>, vector<1x48x256xbf16>
    %25 = vector.shape_cast %24 : vector<1x48x256xbf16> to vector<48x256xbf16>
    %cst_21 = arith.constant 0.000000e+00 : bf16
    %26 = vector.broadcast %cst_21 : bf16 to vector<48x256xbf16>
    %27 = arith.maximumf %25, %26 : vector<48x256xbf16>
    %c0_22 = arith.constant 0 : index
    %c0_23 = arith.constant 0 : index
    %28 = vector.load %arg3[%c0_22, %c0_23] : memref<8x48xbf16, #tpu.memory_space<vmem>>, vector<8x48xbf16>
    %cst_24 = arith.constant dense<0.000000e+00> : vector<8x256xf32>
    %29 = tpu.matmul %28, %27, %cst_24 {dimension_numbers = #tpu.dot_dimension_numbers<[1], [0], [0], [1], [0, 0, 1, 1], [], []>} : vector<8x48xbf16>, vector<48x256xbf16>, vector<8x256xf32> -> vector<8x256xf32>
    %cst_25 = arith.constant dense<0.000000e+00> : vector<8xf32>
    %30 = vector.multi_reduction <add>, %29, %cst_25 [1] : vector<8x256xf32> to vector<8xf32>
    %31 = vector.shape_cast %30 : vector<8xf32> to vector<8x1xf32>
    %cst_26 = arith.constant 3.906250e-03 : f32
    %32 = vector.broadcast %cst_26 : f32 to vector<8x1xf32>
    %33 = arith.mulf %31, %32 : vector<8x1xf32>
    %34 = vector.broadcast %33 : vector<8x1xf32> to vector<8x256xf32>
    %35 = arith.subf %29, %34 : vector<8x256xf32>
    %36 = arith.mulf %35, %35 : vector<8x256xf32>
    %cst_27 = arith.constant dense<0.000000e+00> : vector<8xf32>
    %37 = vector.multi_reduction <add>, %36, %cst_27 [1] : vector<8x256xf32> to vector<8xf32>
    %38 = vector.shape_cast %37 : vector<8xf32> to vector<8x1xf32>
    %c1_28 = arith.constant 1 : index
    %c0_29 = arith.constant 0 : index
    %c0_30 = arith.constant 0 : index
    %c0_31 = arith.constant 0 : index
    %39 = vector.load %arg4[%c1_28, %c0_29, %c0_30, %c0_31] : memref<2x1x8x2xf32, #tpu.memory_space<vmem>>, vector<1x1x8x1xf32>
    %40 = vector.shape_cast %39 : vector<1x1x8x1xf32> to vector<8x1xf32>
    %41 = vector.shape_cast %31 : vector<8x1xf32> to vector<1x1x8x1xf32>
    tpu.vector_store %arg4[%c1_28, %c0_29, %c0_30, %c0_31], %41 {strides = array<i32>} : memref<2x1x8x2xf32, #tpu.memory_space<vmem>>, vector<1x1x8x1xf32>,
    %c1_32 = arith.constant 1 : index
    %c0_33 = arith.constant 0 : index
    %c0_34 = arith.constant 0 : index
    %c1_35 = arith.constant 1 : index
    %42 = vector.load %arg4[%c1_32, %c0_33, %c0_34, %c1_35] : memref<2x1x8x2xf32, #tpu.memory_space<vmem>>, vector<1x1x8x1xf32>
    %43 = vector.shape_cast %42 : vector<1x1x8x1xf32> to vector<8x1xf32>
    %44 = vector.shape_cast %38 : vector<8x1xf32> to vector<1x1x8x1xf32>
    tpu.vector_store %arg4[%c1_32, %c0_33, %c0_34, %c1_35], %44 {strides = array<i32>} : memref<2x1x8x2xf32, #tpu.memory_space<vmem>>, vector<1x1x8x1xf32>,
    %c1_36 = arith.constant 1 : index
    %c0_37 = arith.constant 0 : index
    %c0_38 = arith.constant 0 : index
    %45 = vector.load %arg5[%c1_36, %c0_37, %c0_38] : memref<2x8x256xf32, #tpu.memory_space<vmem>>, vector<1x8x256xf32>
    %46 = vector.shape_cast %45 : vector<1x8x256xf32> to vector<8x256xf32>
    %47 = vector.shape_cast %29 : vector<8x256xf32> to vector<1x8x256xf32>
    tpu.vector_store %arg5[%c1_36, %c0_37, %c0_38], %47 {strides = array<i32>} : memref<2x8x256xf32, #tpu.memory_space<vmem>>, vector<1x8x256xf32>,
    return
  }
  func.func @transform_0(%arg0: i32, %arg1: i32) -> (i32, i32, i32) {
    %c0_i32 = arith.constant 0 : i32
    %c0_i32_0 = arith.constant 0 : i32
    return %arg0, %c0_i32, %arg1 : i32, i32, i32
  }
  func.func @transform_1(%arg0: i32, %arg1: i32) -> (i32, i32) {
    %c0_i32 = arith.constant 0 : i32
    %c0_i32_0 = arith.constant 0 : i32
    %c0_i32_1 = arith.constant 0 : i32
    return %c0_i32, %c0_i32_0 : i32, i32
  }
  func.func @transform_2(%arg0: i32, %arg1: i32) -> (i32, i32, i32, i32) {
    %c0_i32 = arith.constant 0 : i32
    %c0_i32_0 = arith.constant 0 : i32
    %c0_i32_1 = arith.constant 0 : i32
    return %arg0, %arg1, %c0_i32, %c0_i32_0 : i32, i32, i32, i32
  }
  func.func @transform_3(%arg0: i32, %arg1: i32) -> (i32, i32, i32) {
    %c0_i32 = arith.constant 0 : i32
    %c0_i32_0 = arith.constant 0 : i32
    return %arg0, %c0_i32, %arg1 : i32, i32, i32
  }
}

module attributes {stable_mosaic.version = 11 : i64} {
  func.func @_bn_apply_inplace_kernel(%arg0: i32, %arg1: i32, %arg2: memref<2x8x256xf32, #tpu.memory_space<vmem>>, %arg3: memref<2x8x1xf32, #tpu.memory_space<vmem>>, %arg4: memref<2x8x256xf32, #tpu.memory_space<vmem>>) attributes {dimension_semantics = [#tpu.dimension_semantics<parallel>, #tpu.dimension_semantics<parallel>], iteration_bounds = array<i64: 1, 1>, scalar_prefetch = 0 : i64, scratch_operands = 0 : i64, tpu.core_type = #tpu.core_type<tc>, window_params = [{transform_indices = @transform_0, window_bounds = array<i64: 2, 8, 256>}, {pipeline_mode = #tpu.pipeline_mode<synchronous>, transform_indices = @transform_1, window_bounds = array<i64: 2, 8, 1>}, {transform_indices = @transform_2, window_bounds = array<i64: 2, 8, 256>}]} {
    %c0 = arith.constant 0 : index
    %c0_0 = arith.constant 0 : index
    %c0_1 = arith.constant 0 : index
    %0 = vector.load %arg3[%c0, %c0_0, %c0_1] : memref<2x8x1xf32, #tpu.memory_space<vmem>>, vector<1x8x1xf32>
    %1 = vector.shape_cast %0 : vector<1x8x1xf32> to vector<8x1xf32>
    %c1 = arith.constant 1 : index
    %c0_2 = arith.constant 0 : index
    %c0_3 = arith.constant 0 : index
    %2 = vector.load %arg3[%c1, %c0_2, %c0_3] : memref<2x8x1xf32, #tpu.memory_space<vmem>>, vector<1x8x1xf32>
    %3 = vector.shape_cast %2 : vector<1x8x1xf32> to vector<8x1xf32>
    %c0_4 = arith.constant 0 : index
    %c0_5 = arith.constant 0 : index
    %c0_6 = arith.constant 0 : index
    %4 = vector.load %arg2[%c0_4, %c0_5, %c0_6] : memref<2x8x256xf32, #tpu.memory_space<vmem>>, vector<2x8x256xf32>
    %5 = vector.shape_cast %1 : vector<8x1xf32> to vector<1x8x1xf32>
    %6 = vector.broadcast %5 : vector<1x8x1xf32> to vector<2x8x256xf32>
    %7 = arith.mulf %4, %6 : vector<2x8x256xf32>
    %8 = vector.shape_cast %3 : vector<8x1xf32> to vector<1x8x1xf32>
    %9 = vector.broadcast %8 : vector<1x8x1xf32> to vector<2x8x256xf32>
    %10 = arith.addf %7, %9 : vector<2x8x256xf32>
    %c0_7 = arith.constant 0 : index
    %c0_8 = arith.constant 0 : index
    %c0_9 = arith.constant 0 : index
    %11 = vector.load %arg4[%c0_7, %c0_8, %c0_9] : memref<2x8x256xf32, #tpu.memory_space<vmem>>, vector<2x8x256xf32>
    tpu.vector_store %arg4[%c0_7, %c0_8, %c0_9], %10 {strides = array<i32>} : memref<2x8x256xf32, #tpu.memory_space<vmem>>, vector<2x8x256xf32>,
    return
  }
  func.func @transform_0(%arg0: i32, %arg1: i32) -> (i32, i32, i32) {
    %c0_i32 = arith.constant 0 : i32
    %c0_i32_0 = arith.constant 0 : i32
    return %arg0, %c0_i32, %arg1 : i32, i32, i32
  }
  func.func @transform_1(%arg0: i32, %arg1: i32) -> (i32, i32, i32) {
    %c0_i32 = arith.constant 0 : i32
    %c0_i32_0 = arith.constant 0 : i32
    %c0_i32_1 = arith.constant 0 : i32
    %c0_i32_2 = arith.constant 0 : i32
    return %c0_i32, %c0_i32_0, %c0_i32_1 : i32, i32, i32
  }
  func.func @transform_2(%arg0: i32, %arg1: i32) -> (i32, i32, i32) {
    %c0_i32 = arith.constant 0 : i32
    %c0_i32_0 = arith.constant 0 : i32
    return %arg0, %c0_i32, %arg1 : i32, i32, i32
  }
}

</mosaic_0001>

<llo_original>
// kernel: _relu_conv_bn_nchw.3
$region0: #{_relu_conv_bn_nchw.3}
  #allocation0 [shape = 'u32[]', space=smem, size = 0x4, offset = 0x4, fixed_abs, tag = 'smem constant byte address 0x4 - core index']
  #allocation1 [shape = 'u32[144,128]{1,0:T(1,128)}', space=vmem, size = 0x12000, scoped, tag = 'internal scratch']
  %s0 = inlined_call_operand.vmem [shape: f32[2,8,256], index: 0, kind: input, shape index: {}, may-alias: {0,2}]
  %s1 = inlined_call_operand.vmem [shape: f32[2,8,1], index: 1, kind: input, shape index: {}]
  %s2 = inlined_call_operand.vmem [shape: f32[2,8,256], index: 2, kind: output, shape index: {}, may-alias: {0,2}]
  %s3 = sld [smem:[#allocation0]]
  $region18: #{_relu_conv_bn_nchw.3} parent=0
    _
  %s5 = ssub.s32 1, %s3
  %s6 = scalar_select 0, %s5, %s3
  // Predicated region
  $region2: #{_relu_conv_bn_nchw.3} parent=0 // pred_check
    _
  $region3: #{_relu_conv_bn_nchw.3} parent=0 // pred_check_branch
    %8 = sbr.rel (0) target = $region5
  $region4: #{_relu_conv_bn_nchw.3} parent=0 // pred_region
    _
  $region5: #{_relu_conv_bn_nchw.3} parent=0 // pred_fallthru
    _
  // Predicated region
  $region6: #{_relu_conv_bn_nchw.3} parent=0 // pred_check
    _
  $region7: #{_relu_conv_bn_nchw.3} parent=0 // pred_check_branch
    %10 = sbr.rel (0) target = $region9
  $region8: #{_relu_conv_bn_nchw.3} parent=0 // pred_region
    _
  $region9: #{_relu_conv_bn_nchw.3} parent=0 // pred_fallthru
    _
  %v11 = vld [vmem:[%s1] sm:$0xff]
  %s12 = scalar_lea.vmem %s1, 8
  %v13 = vld [vmem:[%s12] sm:$0xff]
  %v14 = vld [vmem:[%s0] sm:$0xff]
  %v15 = vld [vmem:[%s0 + $0x8] sm:$0xff]
  %v16 = vld [vmem:[%s0 + $0x10] sm:$0xff]
  %v17 = vld [vmem:[%s0 + $0x18] sm:$0xff]
  %19 = vset.pattern.permute.xlu0 0
  %20 = vperm.xlu0 %19, %v11
  %v21 = vpop.permute.xlu0 %20
  %v23 = vmul.f32 %v14, %v21
  %v24 = vmul.f32 %v15, %v21
  %v25 = vmul.f32 %v16, %v21
  %v26 = vmul.f32 %v17, %v21
  %28 = vset.pattern.permute.xlu0 0
  %29 = vperm.xlu0 %28, %v13
  %v30 = vpop.permute.xlu0 %29
  %v32 = vadd.f32 %v23, %v30
  %v33 = vadd.f32 %v24, %v30
  %v34 = vadd.f32 %v25, %v30
  %v35 = vadd.f32 %v26, %v30
  %36 = vst [vmem:[%s2] sm:$0xff] %v32
  %37 = vst [vmem:[%s2 + $0x8] sm:$0xff] %v33
  %38 = vst [vmem:[%s2 + $0x10] sm:$0xff] %v34
  %39 = vst [vmem:[%s2 + $0x18] sm:$0xff] %v35
  // Predicated region
  $region10: #{_relu_conv_bn_nchw.3} parent=0 // pred_check
    _
  $region11: #{_relu_conv_bn_nchw.3} parent=0 // pred_check_branch
    %41 = sbr.rel (0) target = $region13
  $region12: #{_relu_conv_bn_nchw.3} parent=0 // pred_region
    _
  $region13: #{_relu_conv_bn_nchw.3} parent=0 // pred_fallthru
    _
  // Predicated region
  $region14: #{_relu_conv_bn_nchw.3} parent=0 // pred_check
    _
  $region15: #{_relu_conv_bn_nchw.3} parent=0 // pred_check_branch
    %43 = sbr.rel (0) target = $region17
  $region16: #{_relu_conv_bn_nchw.3} parent=0 // pred_region
    _
  $region17: #{_relu_conv_bn_nchw.3} parent=0 // pred_fallthru
    _

// kernel: _relu_conv_bn_nchw.2
$region0: #{_relu_conv_bn_nchw.2}
  #allocation0 [shape = 'u32[]', space=smem, size = 0x4, offset = 0x4, fixed_abs, tag = 'smem constant byte address 0x4 - core index']
  #allocation1 [shape = 'u32[144,128]{1,0:T(1,128)}', space=vmem, size = 0x12000, scoped, tag = 'internal scratch']
  %s0 = inlined_call_operand.vmem [shape: bf16[2,48,256], index: 0, kind: input, shape index: {}]
  %s1 = inlined_call_operand.vmem [shape: bf16[8,48], index: 1, kind: input, shape index: {}]
  %s2 = inlined_call_operand.vmem [shape: f32[2,1,8,2], index: 2, kind: output, shape index: {0}]
  %s3 = inlined_call_operand.vmem [shape: f32[2,8,256], index: 3, kind: output, shape index: {1}]
  %4 = xla_tuple %s2, %s3
  %s5 = sld [smem:[#allocation0]]
  $region26: #{_relu_conv_bn_nchw.2} parent=0
    _
  %s7 = ssub.s32 1, %s5
  %s8 = scalar_select 0, %s7, %s5
  // Predicated region
  $region2: #{_relu_conv_bn_nchw.2} parent=0 // pred_check
    _
  $region3: #{_relu_conv_bn_nchw.2} parent=0 // pred_check_branch
    %10 = sbr.rel (0) target = $region5
  $region4: #{_relu_conv_bn_nchw.2} parent=0 // pred_region
    _
  $region5: #{_relu_conv_bn_nchw.2} parent=0 // pred_fallthru
    _
  // Predicated region
  $region6: #{_relu_conv_bn_nchw.2} parent=0 // pred_check
    _
  $region7: #{_relu_conv_bn_nchw.2} parent=0 // pred_check_branch
    %12 = sbr.rel (0) target = $region9
  $region8: #{_relu_conv_bn_nchw.2} parent=0 // pred_region
    _
  $region9: #{_relu_conv_bn_nchw.2} parent=0 // pred_fallthru
    _
  %v14 = vld [vmem:[%s0] sm:$0xff]
  %v15 = vld [vmem:[%s0 + $0x8] sm:$0xff]
  %v16 = vld [vmem:[%s0 + $0x10] sm:$0xff]
  %v17 = vld [vmem:[%s0 + $0x18] sm:$0xff]
  %v18 = vld [vmem:[%s0 + $0x20] sm:$0xff]
  %v19 = vld [vmem:[%s0 + $0x28] sm:$0xff]
  %v20 = vmax.bf16 %v14, 0
  %v21 = vmax.bf16 %v15, 0
  %v22 = vmax.bf16 %v16, 0
  %v23 = vmax.bf16 %v17, 0
  %v24 = vmax.bf16 %v18, 0
  %v25 = vmax.bf16 %v19, 0
  %v26 = vld [vmem:[%s1] sm:$0xf]
  %v33 = vunpack.c.l.b16 %v20
  %v34 = vunpack.c.h.b16 %v20
  %v35 = vunpack.c.l.b16 %v21
  %v36 = vunpack.c.h.b16 %v21
  %v37 = vunpack.c.l.b16 %v22
  %v38 = vunpack.c.h.b16 %v22
  %v39 = vunpack.c.l.b16 %v23
  %v40 = vunpack.c.h.b16 %v23
  %v41 = vunpack.c.l.b16 %v24
  %v42 = vunpack.c.h.b16 %v24
  %v43 = vunpack.c.l.b16 %v25
  %v44 = vunpack.c.h.b16 %v25
  %v45 = vpack.c.b16 %v35, %v33
  %v46 = vpack.c.b16 %v36, %v34
  %v47 = vpack.c.b16 %v39, %v37
  %v48 = vpack.c.b16 %v40, %v38
  %v49 = vpack.c.b16 %v43, %v41
  %v50 = vpack.c.b16 %v44, %v42
  %vm57 = vcmask 392192
  %v59 = vsel %vm57, %v26, 0
  %61 = vmatprep.subr.bf16.mxu0 %v46
  %62 = vmatpush1.bf16.msra.mxu0 %v45
  %63 = vmatprep.subr.bf16.mxu0 %v48
  %64 = vmatpush1.bf16.msra.mxu0 %v47
  %65 = vmatprep.subr.bf16.mxu0 %v50
  %66 = vmatpush1.bf16.msra.mxu0 %v49
  %67 = vmatprep.subr.bf16.mxu0 0
  %68 = vmatpush1.bf16.msra.mxu0 0
  %69 = vmatprep.subr.bf16.mxu0 0
  %70 = vmatpush1.bf16.msra.mxu0 0
  %71 = vmatprep.subr.bf16.mxu0 0
  %72 = vmatpush1.bf16.msra.mxu0 0
  %73 = vmatprep.subr.bf16.mxu0 0
  %74 = vmatpush1.bf16.msra.mxu0 0
  %75 = vmatprep.subr.bf16.mxu0 0
  %76 = vmatpush1.bf16.msra.mxu0 0
  %77 = vmatprep.subr.bf16.mxu0 0
  %78 = vmatpush1.bf16.msra.mxu0 0
  %79 = vmatprep.subr.bf16.mxu0 0
  %80 = vmatpush1.bf16.msra.mxu0 0
  %81 = vmatprep.subr.bf16.mxu0 0
  %82 = vmatpush1.bf16.msra.mxu0 0
  %83 = vmatprep.subr.bf16.mxu0 0
  %84 = vmatpush1.bf16.msra.mxu0 0
  %85 = vmatprep.subr.bf16.mxu0 0
  %86 = vmatpush1.bf16.msra.mxu0 0
  %87 = vmatprep.subr.bf16.mxu0 0
  %88 = vmatpush1.bf16.msra.mxu0 0
  %89 = vmatprep.subr.bf16.mxu0 0
  %90 = vmatpush1.bf16.msra.mxu0 0
  %91 = vmatprep.subr.bf16.mxu0 0
  %92 = vmatpush1.bf16.msra.mxu0 0
  %93 = vmatprep.mubr.bf16.mxu0 0
  %94 = vmatmul.mubr.bf16.gmra.mrb[0].mxu0 %v59
  %v95 = vpop.f32.mrb[0].mxu0
  %v96 = vadd.f32 0.0, %v95
  %v97 = vpop.f32.mrb[0].mxu0
  %v98 = vadd.f32 0.0, %v97
  %v99 = vpop.f32.mrb[0].mxu0
  %v100 = vpop.f32.mrb[0].mxu0
  %101 = vdwg.mxu0
  %v102 = vadd.f32 %v96, %v98
  %103 = vadd.xlane.f32.xlu0 %v102
  %v104 = vpop.xlane.xlu0 %103
  %v105 = vmul.f32 %v104, 0.00390625
  %v106 = vsub.f32 %v96, %v105
  %v107 = vsub.f32 %v98, %v105
  %v108 = vmul.f32 %v106, %v106
  %v109 = vmul.f32 %v107, %v107
  %v110 = vadd.f32 %v108, %v109
  %111 = vadd.xlane.f32.xlu0 %v110
  %v112 = vpop.xlane.xlu0 %111
  %vm113 = vcmask 7168
  %114 = vst.msk [vmem:[%s2] sm:$0xff] %vm113, %v104
  %vm115 = vcmask 15368
  %116 = vst.msk [vmem:[%s2] sm:$0xff] %vm115, %v112
  %117 = vst [vmem:[%s3] sm:$0xff] %v96
  %118 = vst [vmem:[%s3 + $0x8] sm:$0xff] %v98
  %s119 = scalar_lea.vmem %s0, 48
  %v120 = vld [vmem:[%s119] sm:$0xff]
  %v121 = vld [vmem:[%s119 + $0x8] sm:$0xff]
  %v122 = vld [vmem:[%s119 + $0x10] sm:$0xff]
  %v123 = vld [vmem:[%s119 + $0x18] sm:$0xff]
  %v124 = vld [vmem:[%s119 + $0x20] sm:$0xff]
  %v125 = vld [vmem:[%s119 + $0x28] sm:$0xff]
  %v126 = vmax.bf16 %v120, 0
  %v127 = vmax.bf16 %v121, 0
  %v128 = vmax.bf16 %v122, 0
  %v129 = vmax.bf16 %v123, 0
  %v130 = vmax.bf16 %v124, 0
  %v131 = vmax.bf16 %v125, 0
  %v132 = vld [vmem:[%s1] sm:$0xf]
  %v139 = vunpack.c.l.b16 %v126
  %v140 = vunpack.c.h.b16 %v126
  %v141 = vunpack.c.l.b16 %v127
  %v142 = vunpack.c.h.b16 %v127
  %v143 = vunpack.c.l.b16 %v128
  %v144 = vunpack.c.h.b16 %v128
  %v145 = vunpack.c.l.b16 %v129
  %v146 = vunpack.c.h.b16 %v129
  %v147 = vunpack.c.l.b16 %v130
  %v148 = vunpack.c.h.b16 %v130
  %v149 = vunpack.c.l.b16 %v131
  %v150 = vunpack.c.h.b16 %v131
  %v151 = vpack.c.b16 %v141, %v139
  %v152 = vpack.c.b16 %v142, %v140
  %v153 = vpack.c.b16 %v145, %v143
  %v154 = vpack.c.b16 %v146, %v144
  %v155 = vpack.c.b16 %v149, %v147
  %v156 = vpack.c.b16 %v150, %v148
  %v164 = vsel %vm57, %v132, 0
  %166 = vmatprep.subr.bf16.mxu0 %v152
  %167 = vmatpush1.bf16.msra.mxu0 %v151
  %168 = vmatprep.subr.bf16.mxu0 %v154
  %169 = vmatpush1.bf16.msra.mxu0 %v153
  %170 = vmatprep.subr.bf16.mxu0 %v156
  %171 = vmatpush1.bf16.msra.mxu0 %v155
  %172 = vmatprep.subr.bf16.mxu0 0
  %173 = vmatpush1.bf16.msra.mxu0 0
  %174 = vmatprep.subr.bf16.mxu0 0
  %175 = vmatpush1.bf16.msra.mxu0 0
  %176 = vmatprep.subr.bf16.mxu0 0
  %177 = vmatpush1.bf16.msra.mxu0 0
  %178 = vmatprep.subr.bf16.mxu0 0
  %179 = vmatpush1.bf16.msra.mxu0 0
  %180 = vmatprep.subr.bf16.mxu0 0
  %181 = vmatpush1.bf16.msra.mxu0 0
  %182 = vmatprep.subr.bf16.mxu0 0
  %183 = vmatpush1.bf16.msra.mxu0 0
  %184 = vmatprep.subr.bf16.mxu0 0
  %185 = vmatpush1.bf16.msra.mxu0 0
  %186 = vmatprep.subr.bf16.mxu0 0
  %187 = vmatpush1.bf16.msra.mxu0 0
  %188 = vmatprep.subr.bf16.mxu0 0
  %189 = vmatpush1.bf16.msra.mxu0 0
  %190 = vmatprep.subr.bf16.mxu0 0
  %191 = vmatpush1.bf16.msra.mxu0 0
  %192 = vmatprep.subr.bf16.mxu0 0
  %193 = vmatpush1.bf16.msra.mxu0 0
  %194 = vmatprep.subr.bf16.mxu0 0
  %195 = vmatpush1.bf16.msra.mxu0 0
  %196 = vmatprep.subr.bf16.mxu0 0
  %197 = vmatpush1.bf16.msra.mxu0 0
  %198 = vmatprep.mubr.bf16.mxu0 0
  %199 = vmatmul.mubr.bf16.gmra.mrb[0].mxu0 %v164
  %v200 = vpop.f32.mrb[0].mxu0
  %v201 = vadd.f32 0.0, %v200
  %v202 = vpop.f32.mrb[0].mxu0
  %v203 = vadd.f32 0.0, %v202
  %v204 = vpop.f32.mrb[0].mxu0
  %v205 = vpop.f32.mrb[0].mxu0
  %206 = vdwg.mxu0
  %v207 = vadd.f32 %v201, %v203
  %208 = vadd.xlane.f32.xlu0 %v207
  %v209 = vpop.xlane.xlu0 %208
  %v210 = vmul.f32 %v209, 0.00390625
  %v211 = vsub.f32 %v201, %v210
  %v212 = vsub.f32 %v203, %v210
  %v213 = vmul.f32 %v211, %v211
  %v214 = vmul.f32 %v212, %v212
  %v215 = vadd.f32 %v213, %v214
  %216 = vadd.xlane.f32.xlu0 %v215
  %v217 = vpop.xlane.xlu0 %216
  %s218 = scalar_lea.vmem %s2, 8
  %219 = vst.msk [vmem:[%s218] sm:$0xff] %vm113, %v209
  %220 = vst.msk [vmem:[%s218] sm:$0xff] %vm115, %v217
  %s221 = scalar_lea.vmem %s3, 16
  %222 = vst [vmem:[%s221] sm:$0xff] %v201
  %223 = vst [vmem:[%s221 + $0x8] sm:$0xff] %v203
  // Predicated region
  $region10: #{_relu_conv_bn_nchw.2} parent=0 // pred_check
    _
  $region11: #{_relu_conv_bn_nchw.2} parent=0 // pred_check_branch
    %225 = sbr.rel (0) target = $region13
  $region12: #{_relu_conv_bn_nchw.2} parent=0 // pred_region
    _
  $region13: #{_relu_conv_bn_nchw.2} parent=0 // pred_fallthru
    _
  // Predicated region
  $region14: #{_relu_conv_bn_nchw.2} parent=0 // pred_check
    _
  $region15: #{_relu_conv_bn_nchw.2} parent=0 // pred_check_branch
    %227 = sbr.rel (0) target = $region17
  $region16: #{_relu_conv_bn_nchw.2} parent=0 // pred_region
    _
  $region17: #{_relu_conv_bn_nchw.2} parent=0 // pred_fallthru
    _
  // Predicated region
  $region18: #{_relu_conv_bn_nchw.2} parent=0 // pred_check
    _
  $region19: #{_relu_conv_bn_nchw.2} parent=0 // pred_check_branch
    %229 = sbr.rel (0) target = $region21
  $region20: #{_relu_conv_bn_nchw.2} parent=0 // pred_region
    _
  $region21: #{_relu_conv_bn_nchw.2} parent=0 // pred_fallthru
    _
  // Predicated region
  $region22: #{_relu_conv_bn_nchw.2} parent=0 // pred_check
    _
  $region23: #{_relu_conv_bn_nchw.2} parent=0 // pred_check_branch
    %231 = sbr.rel (0) target = $region25
  $region24: #{_relu_conv_bn_nchw.2} parent=0 // pred_region
    _
  $region25: #{_relu_conv_bn_nchw.2} parent=0 // pred_fallthru
    _

</llo_original>
